<compile_context>
chip_gen: v6e
topology: v6e:2x2x1
jax: 0.10.0
libtpu: 0.0.40
codegen_flags: <defaults>
</compile_context>

<pallas_src>
import jax
import jax.numpy as jnp
from jax.experimental import pallas as pl
from jax.experimental.pallas import tpu as pltpu

NEG_INF = -1e30
IGNORE_INDEX = -100


def _make_ce_kernel(v_total, v_block, need_vmask):
    """Online-logsumexp cross-entropy over a (row_tile, vocab_tile) grid."""

    def kernel(labels_ref, logits_ref, loss_ref, m_sc, s_sc, lab_sc):
        j = pl.program_id(1)                 # vocab tile (reduction axis, last)
        nv = pl.num_programs(1)

        # Reset per-row online-softmax state at the start of each vocab sweep.
        @pl.when(j == 0)
        def _():
            m_sc[...] = jnp.full_like(m_sc, NEG_INF)
            s_sc[...] = jnp.zeros_like(s_sc)
            lab_sc[...] = jnp.zeros_like(lab_sc)

        x = logits_ref[...].astype(jnp.float32)     # (tm, tv) f32, cast per tile
        labels = labels_ref[...]                    # (tm, 1) int32
        tm, tv = x.shape

        # Lane index WITHIN this tile.  The tile offset j*v_block is folded
        # into the (tiny) scalar bound / per-row labels instead of being added
        # to the full (tm, tv) iota -> fewer VPU ops per vreg on the hot path.
        lane = jax.lax.broadcasted_iota(jnp.int32, (tm, tv), 1)

        # Mask the vocab tail only when V is not a multiple of the tile width
        # (static flag; cheap VPU select — the kernel is HBM/VPU balanced).
        if need_vmask:
            x = jnp.where(lane < (v_total - j * v_block), x, NEG_INF)

        # Online logsumexp update (all reductions per-row, axis=-1 only).
        m_old = m_sc[...]
        m_new = jnp.maximum(m_old, jnp.max(x, axis=-1, keepdims=True))
        s_sc[...] = (s_sc[...] * jnp.exp(m_old - m_new)
                     + jnp.sum(jnp.exp(x - m_new), axis=-1, keepdims=True))
        m_sc[...] = m_new

        # Accumulate the logit at the label position (one-hot via lane compare
        # against the per-row label shifted into this tile's coordinates;
        # ignore_index never matches, so ignored/padded rows accumulate 0).
        lab_local = labels - j * v_block            # (tm, 1), tiny
        lab_sc[...] += jnp.sum(jnp.where(lane == lab_local, x, 0.0),
                               axis=-1, keepdims=True)

        # End of vocab sweep: emit per-row loss (0 for ignored / padded rows).
        @pl.when(j == nv - 1)
        def _():
            valid = labels != IGNORE_INDEX                        # (tm, 1)
            per_row = m_sc[...] + jnp.log(s_sc[...]) - lab_sc[...]
            loss_ref[...] = jnp.where(valid, per_row, 0.0)

    return kernel


def _round_up(x, m):
    return (x + m - 1) // m * m


def gpt_lm_loss(logits, labels, *, tm=256, tv=None):
    """Mean next-token cross-entropy, matching GPTLMLoss.forward.

    logits: (B, T, V) any float dtype (bf16/f32); labels: (B, T) int.
    tm: row tile (multiple of 8 for f32 / 16 for bf16); tv: vocab tile (x128).
    """
    B, T, V = logits.shape
    N = B * T
    itemsize = jnp.dtype(logits.dtype).itemsize
    row_mult = max(8, 32 // itemsize)          # (8,128) f32, (16,128) bf16, ...

    # Dtype-adaptive vocab tile: keep the streamed HBM block ~2 MiB so the
    # ~0.35 us per-grid-step overhead is amortized on every chip generation.
    if tv is None:
        tv = 2048 if itemsize >= 4 else 4096
    assert tv % 128 == 0

    # Unshifted logits, native dtype — no extra HBM pass over the big tensor.
    logits2d = logits.reshape(N, V)

    # Next-token shift done on the (tiny) label side: position t targets
    # labels[:, t+1]; the last position of each sequence is ignored.
    shifted = jnp.concatenate(
        [labels[:, 1:].astype(jnp.int32),
         jnp.full((B, 1), IGNORE_INDEX, dtype=jnp.int32)], axis=1)
    labels_flat = shifted.reshape(N)

    # Row tiling: pad only the tiny label / output arrays; boundary logits rows
    # (if any) are masked via the ignore_index labels and the per-row select.
    row_block = _round_up(min(tm, _round_up(N, row_mult)), row_mult)
    n_pad = _round_up(N, row_block)
    labels_col = jnp.full((n_pad, 1), IGNORE_INDEX, dtype=jnp.int32)
    labels_col = labels_col.at[:N, 0].set(labels_flat)

    # Vocab tiling: full-extent block for small vocabs, otherwise tv-wide tiles
    # with an in-kernel tail mask (no vocab padding of the logits).
    v_block = V if V <= tv else tv
    nv = pl.cdiv(V, v_block)
    need_vmask = (nv * v_block != V)
    ni = n_pad // row_block

    kernel = _make_ce_kernel(V, v_block, need_vmask)

    # Raise the scoped VMEM limit only when the working set needs it
    # (double-buffered logits block + f32 temporaries); stay under v7x's 64 MiB.
    vmem_est = 2 * row_block * v_block * itemsize + 8 * row_block * v_block * 4
    vmem_limit = None
    if vmem_est > 12 * 1024 * 1024:
        vmem_limit = int(min(vmem_est * 3 // 2, 56 * 1024 * 1024))

    loss_rows = pl.pallas_call(
        kernel,
        out_shape=jax.ShapeDtypeStruct((n_pad, 1), jnp.float32),
        grid_spec=pltpu.PrefetchScalarGridSpec(
            num_scalar_prefetch=0,
            grid=(ni, nv),
            in_specs=[
                pl.BlockSpec((row_block, 1), lambda i, j: (i, 0)),        # labels
                pl.BlockSpec((row_block, v_block), lambda i, j: (i, j)),  # logits
            ],
            out_specs=pl.BlockSpec((row_block, 1), lambda i, j: (i, 0)),  # per-row loss
            scratch_shapes=[
                pltpu.VMEM((row_block, 1), jnp.float32),   # running max
                pltpu.VMEM((row_block, 1), jnp.float32),   # running sumexp
                pltpu.VMEM((row_block, 1), jnp.float32),   # label logit
            ],
        ),
        compiler_params=pltpu.CompilerParams(
            dimension_semantics=("parallel", "arbitrary"),   # rows shard across TCs
            vmem_limit_bytes=vmem_limit),
    )(labels_col, logits2d)

    # Valid-token count comes from the labels alone (no second kernel output);
    # final mean is a pairwise jnp.sum in JAX (also what enables the 'parallel'
    # row axis, since no shared scalar accumulator is needed in the kernel).
    denom = jnp.sum((labels_flat != IGNORE_INDEX).astype(jnp.float32))
    return jnp.sum(loss_rows) / denom


if __name__ == "__main__":
    key = jax.random.PRNGKey(0)
    k1, k2 = jax.random.split(key)

    B, T, V = 2, 8, 32
    logits = jax.random.normal(k1, (B, T, V), dtype=jnp.float32)
    labels = jax.random.randint(k2, (B, T), 0, V, dtype=jnp.int32)

    loss = gpt_lm_loss(logits, labels)
    loss = jax.block_until_ready(loss)

    # Pure-JAX reference (matches torch.nn.CrossEntropyLoss semantics).
    sl = logits[:, :-1, :].reshape(-1, V)
    sb = labels[:, 1:].reshape(-1)
    lse = jax.nn.logsumexp(sl, axis=-1)
    ref = jnp.mean(lse - sl[jnp.arange(sl.shape[0]), sb])

    assert jnp.allclose(loss, ref, rtol=1e-5, atol=1e-5), (loss, ref)
    print("KERNEL_OK")
</pallas_src>

<mosaic_0001>
module attributes {stable_mosaic.version = 11 : i64} {
  func.func @kernel(%arg0: i32, %arg1: i32, %arg2: memref<16x1xi32, #tpu.memory_space<vmem>>, %arg3: memref<16x32xf32, #tpu.memory_space<vmem>>, %arg4: memref<16x1xf32, #tpu.memory_space<vmem>>, %arg5: memref<16x1xf32, #tpu.memory_space<vmem>>, %arg6: memref<16x1xf32, #tpu.memory_space<vmem>>, %arg7: memref<16x1xf32, #tpu.memory_space<vmem>>) attributes {dimension_semantics = [#tpu.dimension_semantics<parallel>, #tpu.dimension_semantics<arbitrary>], iteration_bounds = array<i64: 1, 1>, scalar_prefetch = 0 : i64, scratch_operands = 3 : i64, tpu.core_type = #tpu.core_type<tc>, window_params = [{transform_indices = @transform_0, window_bounds = array<i64: 16, 1>}, {transform_indices = @transform_1, window_bounds = array<i64: 16, 32>}, {transform_indices = @transform_2, window_bounds = array<i64: 16, 1>}]} {
    %c0_i32 = arith.constant 0 : i32
    %0 = arith.cmpi eq, %arg1, %c0_i32 : i32
    %1 = arith.extui %0 : i1 to i32
    %c0_i32_0 = arith.constant 0 : i32
    %2 = arith.cmpi ne, %1, %c0_i32_0 : i32
    scf.if %2 {
      %cst_21 = arith.constant -1.000000e+30 : f32
      %37 = vector.broadcast %cst_21 : f32 to vector<16x1xf32>
      %c0_22 = arith.constant 0 : index
      %c0_23 = arith.constant 0 : index
      %38 = vector.load %arg5[%c0_22, %c0_23] : memref<16x1xf32, #tpu.memory_space<vmem>>, vector<16x1xf32>
      tpu.vector_store %arg5[%c0_22, %c0_23], %37 {strides = array<i32>} : memref<16x1xf32, #tpu.memory_space<vmem>>, vector<16x1xf32>,
      %cst_24 = arith.constant 0.000000e+00 : f32
      %39 = vector.broadcast %cst_24 : f32 to vector<16x1xf32>
      %c0_25 = arith.constant 0 : index
      %c0_26 = arith.constant 0 : index
      %40 = vector.load %arg6[%c0_25, %c0_26] : memref<16x1xf32, #tpu.memory_space<vmem>>, vector<16x1xf32>
      tpu.vector_store %arg6[%c0_25, %c0_26], %39 {strides = array<i32>} : memref<16x1xf32, #tpu.memory_space<vmem>>, vector<16x1xf32>,
      %cst_27 = arith.constant 0.000000e+00 : f32
      %41 = vector.broadcast %cst_27 : f32 to vector<16x1xf32>
      %c0_28 = arith.constant 0 : index
      %c0_29 = arith.constant 0 : index
      %42 = vector.load %arg7[%c0_28, %c0_29] : memref<16x1xf32, #tpu.memory_space<vmem>>, vector<16x1xf32>
      tpu.vector_store %arg7[%c0_28, %c0_29], %41 {strides = array<i32>} : memref<16x1xf32, #tpu.memory_space<vmem>>, vector<16x1xf32>,
    } else {
    }
    %c0 = arith.constant 0 : index
    %c0_1 = arith.constant 0 : index
    %3 = vector.load %arg3[%c0, %c0_1] : memref<16x32xf32, #tpu.memory_space<vmem>>, vector<16x32xf32>
    %c0_2 = arith.constant 0 : index
    %c0_3 = arith.constant 0 : index
    %4 = vector.load %arg2[%c0_2, %c0_3] : memref<16x1xi32, #tpu.memory_space<vmem>>, vector<16x1xi32>
    %5 = tpu.iota {dimensions = array<i32: 1>} : vector<16x32xi32>
    %c0_4 = arith.constant 0 : index
    %c0_5 = arith.constant 0 : index
    %6 = vector.load %arg5[%c0_4, %c0_5] : memref<16x1xf32, #tpu.memory_space<vmem>>, vector<16x1xf32>
    %cst = arith.constant dense<0xFF800000> : vector<16xf32>
    %7 = vector.multi_reduction <maximumf>, %3, %cst [1] : vector<16x32xf32> to vector<16xf32>
    %8 = vector.shape_cast %7 : vector<16xf32> to vector<16x1xf32>
    %9 = arith.maximumf %6, %8 : vector<16x1xf32>
    %c0_6 = arith.constant 0 : index
    %c0_7 = arith.constant 0 : index
    %10 = vector.load %arg6[%c0_6, %c0_7] : memref<16x1xf32, #tpu.memory_space<vmem>>, vector<16x1xf32>
    %11 = arith.subf %6, %9 : vector<16x1xf32>
    %12 = math.exp %11 : vector<16x1xf32>
    %13 = arith.mulf %10, %12 : vector<16x1xf32>
    %14 = vector.broadcast %9 : vector<16x1xf32> to vector<16x32xf32>
    %15 = arith.subf %3, %14 : vector<16x32xf32>
    %16 = math.exp %15 : vector<16x32xf32>
    %cst_8 = arith.constant dense<0.000000e+00> : vector<16xf32>
    %17 = vector.multi_reduction <add>, %16, %cst_8 [1] : vector<16x32xf32> to vector<16xf32>
    %18 = vector.shape_cast %17 : vector<16xf32> to vector<16x1xf32>
    %19 = arith.addf %13, %18 : vector<16x1xf32>
    %c0_9 = arith.constant 0 : index
    %c0_10 = arith.constant 0 : index
    %20 = vector.load %arg6[%c0_9, %c0_10] : memref<16x1xf32, #tpu.memory_space<vmem>>, vector<16x1xf32>
    tpu.vector_store %arg6[%c0_9, %c0_10], %19 {strides = array<i32>} : memref<16x1xf32, #tpu.memory_space<vmem>>, vector<16x1xf32>,
    %c0_11 = arith.constant 0 : index
    %c0_12 = arith.constant 0 : index
    %21 = vector.load %arg5[%c0_11, %c0_12] : memref<16x1xf32, #tpu.memory_space<vmem>>, vector<16x1xf32>
    tpu.vector_store %arg5[%c0_11, %c0_12], %9 {strides = array<i32>} : memref<16x1xf32, #tpu.memory_space<vmem>>, vector<16x1xf32>,
    %c32_i32 = arith.constant 32 : i32
    %22 = arith.muli %arg1, %c32_i32 : i32
    %23 = vector.broadcast %22 : i32 to vector<16x1xi32>
    %24 = arith.subi %4, %23 : vector<16x1xi32>
    %c0_13 = arith.constant 0 : index
    %c0_14 = arith.constant 0 : index
    %25 = vector.load %arg7[%c0_13, %c0_14] : memref<16x1xf32, #tpu.memory_space<vmem>>, vector<16x1xf32>
    %26 = vector.broadcast %24 : vector<16x1xi32> to vector<16x32xi32>
    %27 = arith.cmpi eq, %5, %26 : vector<16x32xi32>
    %cst_15 = arith.constant 0.000000e+00 : f32
    %28 = vector.broadcast %cst_15 : f32 to vector<16x32xf32>
    %29 = arith.select %27, %3, %28 : vector<16x32xi1>, vector<16x32xf32>
    %cst_16 = arith.constant dense<0.000000e+00> : vector<16xf32>
    %30 = vector.multi_reduction <add>, %29, %cst_16 [1] : vector<16x32xf32> to vector<16xf32>
    %31 = vector.shape_cast %30 : vector<16xf32> to vector<16x1xf32>
    %32 = arith.addf %25, %31 : vector<16x1xf32>
    %c0_17 = arith.constant 0 : index
    %c0_18 = arith.constant 0 : index
    %33 = vector.load %arg7[%c0_17, %c0_18] : memref<16x1xf32, #tpu.memory_space<vmem>>, vector<16x1xf32>
    tpu.vector_store %arg7[%c0_17, %c0_18], %32 {strides = array<i32>} : memref<16x1xf32, #tpu.memory_space<vmem>>, vector<16x1xf32>,
    %c0_i32_19 = arith.constant 0 : i32
    %34 = arith.cmpi eq, %arg1, %c0_i32_19 : i32
    %35 = arith.extui %34 : i1 to i32
    %c0_i32_20 = arith.constant 0 : i32
    %36 = arith.cmpi ne, %35, %c0_i32_20 : i32
    scf.if %36 {
      %c-100_i32 = arith.constant -100 : i32
      %37 = vector.broadcast %c-100_i32 : i32 to vector<16x1xi32>
      %38 = arith.cmpi ne, %4, %37 : vector<16x1xi32>
      %c0_21 = arith.constant 0 : index
      %c0_22 = arith.constant 0 : index
      %39 = vector.load %arg5[%c0_21, %c0_22] : memref<16x1xf32, #tpu.memory_space<vmem>>, vector<16x1xf32>
      %c0_23 = arith.constant 0 : index
      %c0_24 = arith.constant 0 : index
      %40 = vector.load %arg6[%c0_23, %c0_24] : memref<16x1xf32, #tpu.memory_space<vmem>>, vector<16x1xf32>
      %41 = math.log %40 : vector<16x1xf32>
      %42 = arith.addf %39, %41 : vector<16x1xf32>
      %c0_25 = arith.constant 0 : index
      %c0_26 = arith.constant 0 : index
      %43 = vector.load %arg7[%c0_25, %c0_26] : memref<16x1xf32, #tpu.memory_space<vmem>>, vector<16x1xf32>
      %44 = arith.subf %42, %43 : vector<16x1xf32>
      %cst_27 = arith.constant 0.000000e+00 : f32
      %45 = vector.broadcast %cst_27 : f32 to vector<16x1xf32>
      %46 = arith.select %38, %44, %45 : vector<16x1xi1>, vector<16x1xf32>
      %c0_28 = arith.constant 0 : index
      %c0_29 = arith.constant 0 : index
      %47 = vector.load %arg4[%c0_28, %c0_29] : memref<16x1xf32, #tpu.memory_space<vmem>>, vector<16x1xf32>
      tpu.vector_store %arg4[%c0_28, %c0_29], %46 {strides = array<i32>} : memref<16x1xf32, #tpu.memory_space<vmem>>, vector<16x1xf32>,
    } else {
    }
    return
  }
  func.func @transform_0(%arg0: i32, %arg1: i32) -> (i32, i32) {
    %c0_i32 = arith.constant 0 : i32
    %c0_i32_0 = arith.constant 0 : i32
    return %arg0, %c0_i32 : i32, i32
  }
  func.func @transform_1(%arg0: i32, %arg1: i32) -> (i32, i32) {
    %c0_i32 = arith.constant 0 : i32
    return %arg0, %arg1 : i32, i32
  }
  func.func @transform_2(%arg0: i32, %arg1: i32) -> (i32, i32) {
    %c0_i32 = arith.constant 0 : i32
    %c0_i32_0 = arith.constant 0 : i32
    return %arg0, %c0_i32 : i32, i32
  }
}

</mosaic_0001>

<llo_original>
// kernel: tpu_custom_call.1
$region0: #{tpu_custom_call.1}
  #allocation0 [shape = 'u32[]', space=smem, size = 0x4, offset = 0x4, fixed_abs, tag = 'smem constant byte address 0x4 - core index']
  #allocation1 [shape = 'u32[144,128]{1,0:T(1,128)}', space=vmem, size = 0x12000, scoped, tag = 'internal scratch']
  #allocation2 [shape = 'f32[16,1]{1,0:T(8,128)}', space=vmem, size = 0x2000, scoped, tag = 'scratch operand']
  #allocation3 [shape = 'f32[16,1]{1,0:T(8,128)}', space=vmem, size = 0x2000, scoped, tag = 'scratch operand']
  #allocation4 [shape = 'f32[16,1]{1,0:T(8,128)}', space=vmem, size = 0x2000, scoped, tag = 'scratch operand']
  %s0 = inlined_call_operand.vmem [shape: s32[16,1], index: 0, kind: input, shape index: {}]
  %s1 = inlined_call_operand.vmem [shape: f32[16,32], index: 1, kind: input, shape index: {}]
  %s2 = inlined_call_operand.vmem [shape: f32[16,1], index: 2, kind: output, shape index: {}]
  %s3 = sld [smem:[#allocation0]]
  $region26: #{tpu_custom_call.1} parent=0
    _
  %s5 = ssub.s32 1, %s3
  %s6 = scalar_select 0, %s5, %s3
  // Predicated region
  $region2: #{tpu_custom_call.1} parent=0 // pred_check
    _
  $region3: #{tpu_custom_call.1} parent=0 // pred_check_branch
    %8 = sbr.rel (0) target = $region5
  $region4: #{tpu_custom_call.1} parent=0 // pred_region
    _
  $region5: #{tpu_custom_call.1} parent=0 // pred_fallthru
    _
  // Predicated region
  $region6: #{tpu_custom_call.1} parent=0 // pred_check
    _
  $region7: #{tpu_custom_call.1} parent=0 // pred_check_branch
    %10 = sbr.rel (0) target = $region9
  $region8: #{tpu_custom_call.1} parent=0 // pred_region
    _
  $region9: #{tpu_custom_call.1} parent=0 // pred_fallthru
    _
  %p11 = scmp.eq.s32.totalorder 0, 0
  // Predicated region
  $region10: #{tpu_custom_call.1} parent=0 // pred_check
    %p12 = pneg %p11
  $region11: #{tpu_custom_call.1} parent=0 // pred_check_branch
    %14 = sbr.rel (%p12) target = $region13
  $region12: #{tpu_custom_call.1} parent=0 // pred_region
    %vm15 = vcmask 7168
    %16 = vst.msk [vmem:[#allocation2] sm:$0xff] %vm15, -1e+30
    %17 = vst.msk [vmem:[#allocation2 + $0x8] sm:$0xff] %vm15, -1e+30
    %18 = vst.msk [vmem:[#allocation3] sm:$0xff] %vm15, 0.0
    %19 = vst.msk [vmem:[#allocation3 + $0x8] sm:$0xff] %vm15, 0.0
    %20 = vst.msk [vmem:[#allocation4] sm:$0xff] %vm15, 0.0
    %21 = vst.msk [vmem:[#allocation4 + $0x8] sm:$0xff] %vm15, 0.0
  $region13: #{tpu_custom_call.1} parent=0 // pred_fallthru
    _
  %v22 = vld [vmem:[%s1] sm:$0xff]
  %v23 = vld [vmem:[%s1 + $0x8] sm:$0xff]
  %v24 = vld [vmem:[%s0] sm:$0xff]
  %v25 = vld [vmem:[%s0 + $0x8] sm:$0xff]
  %v26 = vlaneseq
  %v27 = vand.u32 %v26, 127
  %v28 = vld [vmem:[#allocation2] sm:$0xff]
  %v29 = vld [vmem:[#allocation2 + $0x8] sm:$0xff]
  %vm30 = vcmask 261120
  %v31 = vsel %vm30, %v22, -inf
  %32 = vmax.xlane.f32.xlu0 %v31
  %v33 = vpop.xlane.xlu0 %32
  %v34 = vsel %vm30, %v23, -inf
  %35 = vmax.xlane.f32.xlu0 %v34
  %v36 = vpop.xlane.xlu0 %35
  %v37 = vmax.f32 %v28, %v33
  %v38 = vmax.f32 %v29, %v36
  %v39 = vld [vmem:[#allocation3] sm:$0xff]
  %v40 = vld [vmem:[#allocation3 + $0x8] sm:$0xff]
  %v41 = vsub.f32 %v28, %v37
  %v42 = vsub.f32 %v29, %v38
  %v43 = vmul.f32 %v41, 1.442695
  %v44 = vpow.pop %v43
  %v45 = vmul.f32 %v42, 1.442695
  %v46 = vpow.pop %v45
  %v47 = vmul.f32 %v39, %v44
  %v48 = vmul.f32 %v40, %v46
  %50 = vset.pattern.permute.xlu0 0
  %51 = vperm.xlu0 %50, %v37
  %v52 = vpop.permute.xlu0 %51
  %55 = vset.pattern.permute.xlu0 0
  %56 = vperm.xlu0 %55, %v38
  %v57 = vpop.permute.xlu0 %56
  %v59 = vsub.f32 %v22, %v52
  %v60 = vsub.f32 %v23, %v57
  %v61 = vmul.f32 %v59, 1.442695
  %v62 = vpow.pop %v61
  %v63 = vmul.f32 %v60, 1.442695
  %v64 = vpow.pop %v63
  %v65 = vsel %vm30, %v62, 0.0
  %66 = vadd.xlane.f32.xlu0 %v65
  %v67 = vpop.xlane.xlu0 %66
  %v68 = vsel %vm30, %v64, 0.0
  %69 = vadd.xlane.f32.xlu0 %v68
  %v70 = vpop.xlane.xlu0 %69
  %v71 = vadd.f32 %v47, %v67
  %v72 = vadd.f32 %v48, %v70
  %vm73 = vcmask 7168
  %74 = vst.msk [vmem:[#allocation3] sm:$0xff] %vm73, %v71
  %75 = vst.msk [vmem:[#allocation3 + $0x8] sm:$0xff] %vm73, %v72
  %76 = vst.msk [vmem:[#allocation2] sm:$0xff] %vm73, %v37
  %77 = vst.msk [vmem:[#allocation2 + $0x8] sm:$0xff] %vm73, %v38
  %s78 = smul.u32 0, 32
  %v79 = vstv %s78
  %v80 = vsub.s32 %v24, %v79
  %v81 = vsub.s32 %v25, %v79
  %v82 = vld [vmem:[#allocation4] sm:$0xff]
  %v83 = vld [vmem:[#allocation4 + $0x8] sm:$0xff]
  %84 = vset.pattern.permute.xlu0 0
  %85 = vperm.xlu0 %84, %v80
  %v86 = vpop.permute.xlu0 %85
  %87 = vset.pattern.permute.xlu0 0
  %88 = vperm.xlu0 %87, %v81
  %v89 = vpop.permute.xlu0 %88
  %vm90 = vcmp.eq.s32.totalorder %v27, %v86
  %vm91 = vcmp.eq.s32.totalorder %v27, %v89
  %v92 = vsel %vm90, %v22, 0.0
  %v93 = vsel %vm91, %v23, 0.0
  %v94 = vsel %vm30, %v92, 0.0
  %95 = vadd.xlane.f32.xlu0 %v94
  %v96 = vpop.xlane.xlu0 %95
  %v97 = vsel %vm30, %v93, 0.0
  %98 = vadd.xlane.f32.xlu0 %v97
  %v99 = vpop.xlane.xlu0 %98
  %v100 = vadd.f32 %v82, %v96
  %v101 = vadd.f32 %v83, %v99
  %102 = vst.msk [vmem:[#allocation4] sm:$0xff] %vm73, %v100
  %103 = vst.msk [vmem:[#allocation4 + $0x8] sm:$0xff] %vm73, %v101
  // Predicated region
  $region14: #{tpu_custom_call.1} parent=0 // pred_check
    %p104 = pneg %p11
  $region15: #{tpu_custom_call.1} parent=0 // pred_check_branch
    %106 = sbr.rel (%p104) target = $region17
  $region16: #{tpu_custom_call.1} parent=0 // pred_region
    %vm107 = vcmp.ne.s32.totalorder %v24, 4294967196
    %vm108 = vcmp.ne.s32.totalorder %v25, 4294967196
    %v109 = vld [vmem:[#allocation2] sm:$0xff]
    %v110 = vld [vmem:[#allocation2 + $0x8] sm:$0xff]
    %v111 = vld [vmem:[#allocation3] sm:$0xff]
    %v112 = vld [vmem:[#allocation3 + $0x8] sm:$0xff]
    %v113 = vlog2.pop %v111
    %v114 = vmul.f32 %v113, 0.6931472
    %v115 = vlog2.pop %v112
    %v116 = vmul.f32 %v115, 0.6931472
    %v117 = vadd.f32 %v109, %v114
    %v118 = vadd.f32 %v110, %v116
    %v119 = vld [vmem:[#allocation4] sm:$0xff]
    %v120 = vld [vmem:[#allocation4 + $0x8] sm:$0xff]
    %v121 = vsub.f32 %v117, %v119
    %v122 = vsub.f32 %v118, %v120
    %v123 = vsel %vm107, %v121, 0.0
    %v124 = vsel %vm108, %v122, 0.0
    %125 = vst.msk [vmem:[%s2] sm:$0xff] %vm73, %v123
    %126 = vst.msk [vmem:[%s2 + $0x8] sm:$0xff] %vm73, %v124
  $region17: #{tpu_custom_call.1} parent=0 // pred_fallthru
    _
  // Predicated region
  $region18: #{tpu_custom_call.1} parent=0 // pred_check
    _
  $region19: #{tpu_custom_call.1} parent=0 // pred_check_branch
    %128 = sbr.rel (0) target = $region21
  $region20: #{tpu_custom_call.1} parent=0 // pred_region
    _
  $region21: #{tpu_custom_call.1} parent=0 // pred_fallthru
    _
  // Predicated region
  $region22: #{tpu_custom_call.1} parent=0 // pred_check
    _
  $region23: #{tpu_custom_call.1} parent=0 // pred_check_branch
    %130 = sbr.rel (0) target = $region25
  $region24: #{tpu_custom_call.1} parent=0 // pred_region
    _
  $region25: #{tpu_custom_call.1} parent=0 // pred_fallthru
    _

</llo_original>
